<compile_context>
chip_gen: v7x
topology: tpu7x:2x2x1
jax: 0.10.0
libtpu: 0.0.40
codegen_flags: <defaults>
</compile_context>

<pallas_src>
import functools

import jax
import jax.numpy as jnp
from jax.experimental import pallas as pl
from jax.experimental.pallas import tpu as pltpu

_LN_EPS = 1e-5                  # PyTorch nn.LayerNorm default
_GELU_C = 0.7978845608028654    # sqrt(2/pi), gelu_new tanh approximation


def _round_up(n, m):
    return ((n + m - 1) // m) * m


def _sublane_multiple(dtype):
    # sub-32-bit dtypes pack rows along sublanes; keep streamed x/out tiles fully packed
    return {4: 8, 2: 16, 1: 32}.get(jnp.dtype(dtype).itemsize, 8)


def _vmem_capacity_bytes():
    try:
        return int(pltpu.get_tpu_info().vmem_capacity_bytes)
    except Exception:
        return 64 * 1024 * 1024   # conservative per-TC default (v7x-sized)


def _adapter_kernel(x_ref, p_ref, wd_ref, wu_ref, o_ref, *, hidden, down_p):
    """One token tile: pre-LN -> down-proj -> gelu_new -> up-proj -> post-LN -> +residual."""
    x = x_ref[...].astype(jnp.float32)

    # Packed broadcast params (single resident (8, P) f32 tile), static slices.
    g_pre = p_ref[0:1, :hidden]
    b_pre = p_ref[1:2, :hidden]
    b_down = p_ref[2:3, :down_p]
    b_up = p_ref[3:4, :hidden]
    g_post = p_ref[4:5, :hidden]
    b_post = p_ref[5:6, :hidden]
    w_down = wd_ref[...]   # bf16 MXU operand
    w_up = wu_ref[...]     # bf16 MXU operand

    inv_h = 1.0 / float(hidden)

    # ---- pre layer norm (one pass: var = E[x^2] - mu^2, clamped for safety) ----
    mu = jnp.sum(x, axis=-1, keepdims=True) * inv_h
    ex2 = jnp.sum(x * x, axis=-1, keepdims=True) * inv_h
    var = jnp.maximum(ex2 - mu * mu, 0.0)
    z = (x - mu) * jax.lax.rsqrt(var + _LN_EPS) * g_pre + b_pre

    # ---- adapter down projection (bf16 MXU inputs, f32 accumulation) ----
    h = jnp.dot(z.astype(w_down.dtype), w_down,
                preferred_element_type=jnp.float32) + b_down

    # ---- gelu_new (tanh approximation, f32 on VPU/EUP) ----
    h = 0.5 * h * (1.0 + jnp.tanh(_GELU_C * (h + 0.044715 * (h * h) * h)))

    # ---- adapter up projection ----
    u = jnp.dot(h.astype(w_up.dtype), w_up,
                preferred_element_type=jnp.float32) + b_up

    # ---- post layer norm ----
    mu2 = jnp.sum(u, axis=-1, keepdims=True) * inv_h
    eu2 = jnp.sum(u * u, axis=-1, keepdims=True) * inv_h
    var2 = jnp.maximum(eu2 - mu2 * mu2, 0.0)
    y = (u - mu2) * jax.lax.rsqrt(var2 + _LN_EPS) * g_post + b_post

    # ---- residual add: re-read the resident x block so the f32 copy of x is not
    # kept live across both matmuls ----
    o_ref[...] = (y + x_ref[...].astype(jnp.float32)).astype(o_ref.dtype)


def _pick_token_tile(tokens, hidden, down_p, *, x_bytes, w_bytes, max_tile,
                     vmem_budget, sub, resident_bufs):
    """Largest row tile (multiple of `sub`, <= max_tile) such that the double-buffered
    streamed tiles + resident weights/params + f32 temporaries fit the VMEM budget,
    with a 10% margin for Mosaic internal scratch."""
    weights = resident_bufs * 2 * hidden * down_p * w_bytes        # W_down + W_up
    p_bytes = resident_bufs * 8 * max(hidden, down_p) * 4          # packed LN/bias params
    if int(1.10 * (weights + p_bytes)) > vmem_budget:
        # TODO(synk): K-tiled (hidden-split) variant for very large hidden*down.
        raise ValueError("resident adapter weights alone exceed the VMEM budget")
    tile = _round_up(min(max_tile, _round_up(tokens, sub)), sub)
    while True:
        stream = 2 * (2 * tile * hidden * x_bytes)                 # x + out, double-buffered
        temps = 3 * tile * hidden * 4 + 2 * tile * down_p * 4      # f32 z/u/y + h/gelu
        if int(1.10 * (stream + weights + p_bytes + temps)) <= vmem_budget or tile <= sub:
            return tile
        tile = _round_up(max(tile // 2, sub), sub)


def _build_call(kernel, tokens, hidden, down_p, pdim, tile, out_dtype, *,
                single_buffer_resident, vmem_limit_bytes):
    if single_buffer_resident:
        def resident(shape):
            return pl.BlockSpec(shape, lambda i: (0, 0), pipeline_mode=pl.Buffered(1))
    else:
        def resident(shape):
            return pl.BlockSpec(shape, lambda i: (0, 0))

    return pl.pallas_call(
        kernel,
        out_shape=jax.ShapeDtypeStruct((tokens, hidden), out_dtype),
        grid_spec=pltpu.PrefetchScalarGridSpec(
            num_scalar_prefetch=0,
            grid=(pl.cdiv(tokens, tile),),     # ragged last block: masked edge loads/stores
            in_specs=[
                # TODO(synk): sweep pipeline_mode=pl.Buffered(3) on x for v7x.
                pl.BlockSpec((tile, hidden), lambda i: (i, 0)),   # x (streamed)
                resident((8, pdim)),                              # packed LN params + biases
                resident((hidden, down_p)),                       # W_down (bf16, resident)
                resident((down_p, hidden)),                       # W_up (bf16, resident)
            ],
            out_specs=pl.BlockSpec((tile, hidden), lambda i: (i, 0)),
        ),
        compiler_params=pltpu.CompilerParams(
            dimension_semantics=("parallel",),   # shard token axis across TCs (v7x)
            vmem_limit_bytes=vmem_limit_bytes),
    )


def adapter_controller_forward(x, params, *, max_token_tile=None,
                               mxu_dtype=jnp.bfloat16,
                               vmem_budget_bytes=None,
                               vmem_limit_bytes=None):
    """x: [..., hidden]. params: dict of adapter / LN parameters (see make_params)."""
    orig_shape = x.shape
    hidden = orig_shape[-1]
    x2d = x.reshape(-1, hidden)
    tokens = x2d.shape[0]
    down = params["w_down"].shape[1]

    # ---- lane-pad the adapter bottleneck to a multiple of 128 (exact no-op) ----
    down_p = max(_round_up(down, 128), 128)
    w_down, w_up, b_down = params["w_down"], params["w_up"], params["b_down"]
    if down_p != down:
        w_down = jnp.pad(w_down, ((0, 0), (0, down_p - down)))
        b_down = jnp.pad(b_down, (0, down_p - down))
        w_up = jnp.pad(w_up, ((0, down_p - down), (0, 0)))
    w_down = w_down.astype(mxu_dtype)   # MXU operands; accumulation stays f32 in-kernel
    w_up = w_up.astype(mxu_dtype)

    # ---- pack the six broadcast vectors into one resident (8, P) f32 sublane tile ----
    pdim = max(hidden, down_p)
    packed = jnp.zeros((8, pdim), jnp.float32)
    packed = packed.at[0, :hidden].set(params["ln_pre_gamma"].astype(jnp.float32))
    packed = packed.at[1, :hidden].set(params["ln_pre_beta"].astype(jnp.float32))
    packed = packed.at[2, :down_p].set(b_down.astype(jnp.float32))
    packed = packed.at[3, :hidden].set(params["b_up"].astype(jnp.float32))
    packed = packed.at[4, :hidden].set(params["ln_post_gamma"].astype(jnp.float32))
    packed = packed.at[5, :hidden].set(params["ln_post_beta"].astype(jnp.float32))

    # ---- generation-aware VMEM budget / limit ----
    cap = _vmem_capacity_bytes()
    if vmem_budget_bytes is None:
        vmem_budget_bytes = int(0.70 * cap)   # v5e/v6e ~90 MiB, v7x ~45 MiB
    if vmem_limit_bytes is None:
        vmem_limit_bytes = int(0.85 * cap)    # leave headroom for Mosaic internal scratch

    if max_token_tile is None:                # small hidden -> bigger tiles amortize step cost
        max_token_tile = 2048 if hidden <= 1024 else (1024 if hidden <= 2048 else 512)

    sub = _sublane_multiple(x2d.dtype)
    w_bytes = jnp.dtype(mxu_dtype).itemsize
    kernel = functools.partial(_adapter_kernel, hidden=hidden, down_p=down_p)

    def run(single_buffer):
        tile = _pick_token_tile(tokens, hidden, down_p,
                                x_bytes=x2d.dtype.itemsize, w_bytes=w_bytes,
                                max_tile=max_token_tile, vmem_budget=vmem_budget_bytes,
                                sub=sub, resident_bufs=1 if single_buffer else 2)
        call = _build_call(kernel, tokens, hidden, down_p, pdim, tile, x2d.dtype,
                           single_buffer_resident=single_buffer,
                           vmem_limit_bytes=vmem_limit_bytes)
        return call(x2d, packed, w_down, w_up)

    try:
        out = run(single_buffer=True)
    except Exception:
        # Fallback for jax versions that reject pl.Buffered(1) single-buffering.
        out = run(single_buffer=False)

    return out.reshape(orig_shape)


def make_params(key, hidden, down, dtype=jnp.float32):
    """Deterministic synthetic parameters (shapes match Adapter.__init__)."""
    k1, k2, k3, k4 = jax.random.split(key, 4)
    scale_d = 1.0 / jnp.sqrt(hidden)
    scale_u = 1.0 / jnp.sqrt(down)
    return {
        # stored as (in, out) -> transpose of PyTorch nn.Linear.weight
        "w_down": (jax.random.normal(k1, (hidden, down)) * scale_d).astype(dtype),
        "b_down": (jax.random.normal(k2, (down,)) * 0.01).astype(dtype),
        "w_up": (jax.random.normal(k3, (down, hidden)) * scale_u).astype(dtype),
        "b_up": (jax.random.normal(k4, (hidden,)) * 0.01).astype(dtype),
        "ln_pre_gamma": jnp.ones((hidden,), dtype),
        "ln_pre_beta": jnp.zeros((hidden,), dtype),
        "ln_post_gamma": jnp.ones((hidden,), dtype),
        "ln_post_beta": jnp.zeros((hidden,), dtype),
    }


def _reference(x, params, *, mxu_dtype=jnp.bfloat16):
    """Plain-JAX reference emulating the kernel's numerics (bf16 MXU inputs, f32 accum)."""
    f32 = jnp.float32

    def ln(v, g, b):
        mu = v.mean(-1, keepdims=True)
        var = ((v - mu) ** 2).mean(-1, keepdims=True)
        return (v - mu) * jax.lax.rsqrt(var + _LN_EPS) * g + b

    wd = params["w_down"].astype(mxu_dtype).astype(f32)
    wu = params["w_up"].astype(mxu_dtype).astype(f32)
    xf = x.astype(f32)
    z = ln(xf, params["ln_pre_gamma"], params["ln_pre_beta"])
    h = z.astype(mxu_dtype).astype(f32) @ wd + params["b_down"]
    h = 0.5 * h * (1.0 + jnp.tanh(_GELU_C * (h + 0.044715 * h ** 3)))
    u = h.astype(mxu_dtype).astype(f32) @ wu + params["b_up"]
    y = ln(u, params["ln_post_gamma"], params["ln_post_beta"])
    return (y + xf).astype(x.dtype)


if __name__ == "__main__":
    hidden, down = 32, 8
    key = jax.random.PRNGKey(0)
    kx1, kx2, kp = jax.random.split(key, 3)
    params = make_params(kp, hidden, down)

    # 1) tile-divisible token count
    x1 = jax.random.normal(kx1, (2, 8, hidden), jnp.float32)
    out1 = adapter_controller_forward(x1, params)
    jax.block_until_ready(out1)
    ref1 = _reference(x1, params)
    assert out1.shape == x1.shape
    assert bool(jnp.all(jnp.isfinite(out1))), "non-finite values in kernel output"
    assert jnp.allclose(out1, ref1, atol=2e-3, rtol=2e-3), "mismatch vs reference (divisible)"

    # 2) non-divisible token count -> ragged last block, masked edge stores
    x2 = jax.random.normal(kx2, (3, 7, hidden), jnp.float32)   # 21 tokens
    out2 = adapter_controller_forward(x2, params)
    jax.block_until_ready(out2)
    ref2 = _reference(x2, params)
    assert out2.shape == x2.shape
    assert bool(jnp.all(jnp.isfinite(out2))), "non-finite values in ragged kernel output"
    assert jnp.allclose(out2, ref2, atol=2e-3, rtol=2e-3), "mismatch vs reference (ragged)"

    print("KERNEL_OK")
</pallas_src>

<mosaic_0001>
module attributes {stable_mosaic.version = 11 : i64} {
  func.func @_adapter_kernel(%arg0: i32, %arg1: memref<16x32xf32, #tpu.memory_space<vmem>>, %arg2: memref<8x128xf32, #tpu.memory_space<vmem>>, %arg3: memref<32x128xbf16, #tpu.memory_space<vmem>>, %arg4: memref<128x32xbf16, #tpu.memory_space<vmem>>, %arg5: memref<16x32xf32, #tpu.memory_space<vmem>>) attributes {dimension_semantics = [#tpu.dimension_semantics<parallel>], iteration_bounds = array<i64: 1>, scalar_prefetch = 0 : i64, scratch_operands = 0 : i64, tpu.core_type = #tpu.core_type<tc>, window_params = [{transform_indices = @transform_0, window_bounds = array<i64: 16, 32>}, {pipeline_mode = #tpu.pipeline_mode<synchronous>, transform_indices = @transform_1, window_bounds = array<i64: 8, 128>}, {pipeline_mode = #tpu.pipeline_mode<synchronous>, transform_indices = @transform_2, window_bounds = array<i64: 32, 128>}, {pipeline_mode = #tpu.pipeline_mode<synchronous>, transform_indices = @transform_3, window_bounds = array<i64: 128, 32>}, {transform_indices = @transform_4, window_bounds = array<i64: 16, 32>}]} {
    %c0 = arith.constant 0 : index
    %c0_0 = arith.constant 0 : index
    %0 = vector.load %arg1[%c0, %c0_0] : memref<16x32xf32, #tpu.memory_space<vmem>>, vector<16x32xf32>
    %c0_1 = arith.constant 0 : index
    %c0_2 = arith.constant 0 : index
    %1 = vector.load %arg2[%c0_1, %c0_2] : memref<8x128xf32, #tpu.memory_space<vmem>>, vector<1x32xf32>
    %c1 = arith.constant 1 : index
    %c0_3 = arith.constant 0 : index
    %2 = vector.load %arg2[%c1, %c0_3] : memref<8x128xf32, #tpu.memory_space<vmem>>, vector<1x32xf32>
    %c2 = arith.constant 2 : index
    %c0_4 = arith.constant 0 : index
    %3 = vector.load %arg2[%c2, %c0_4] : memref<8x128xf32, #tpu.memory_space<vmem>>, vector<1x128xf32>
    %c3 = arith.constant 3 : index
    %c0_5 = arith.constant 0 : index
    %4 = vector.load %arg2[%c3, %c0_5] : memref<8x128xf32, #tpu.memory_space<vmem>>, vector<1x32xf32>
    %c4 = arith.constant 4 : index
    %c0_6 = arith.constant 0 : index
    %5 = vector.load %arg2[%c4, %c0_6] : memref<8x128xf32, #tpu.memory_space<vmem>>, vector<1x32xf32>
    %c5 = arith.constant 5 : index
    %c0_7 = arith.constant 0 : index
    %6 = vector.load %arg2[%c5, %c0_7] : memref<8x128xf32, #tpu.memory_space<vmem>>, vector<1x32xf32>
    %c0_8 = arith.constant 0 : index
    %c0_9 = arith.constant 0 : index
    %7 = vector.load %arg3[%c0_8, %c0_9] : memref<32x128xbf16, #tpu.memory_space<vmem>>, vector<32x128xbf16>
    %c0_10 = arith.constant 0 : index
    %c0_11 = arith.constant 0 : index
    %8 = vector.load %arg4[%c0_10, %c0_11] : memref<128x32xbf16, #tpu.memory_space<vmem>>, vector<128x32xbf16>
    %cst = arith.constant dense<0.000000e+00> : vector<16xf32>
    %9 = vector.multi_reduction <add>, %0, %cst [1] : vector<16x32xf32> to vector<16xf32>
    %10 = vector.shape_cast %9 : vector<16xf32> to vector<16x1xf32>
    %cst_12 = arith.constant 3.125000e-02 : f32
    %11 = vector.broadcast %cst_12 : f32 to vector<16x1xf32>
    %12 = arith.mulf %10, %11 : vector<16x1xf32>
    %13 = arith.mulf %0, %0 : vector<16x32xf32>
    %cst_13 = arith.constant dense<0.000000e+00> : vector<16xf32>
    %14 = vector.multi_reduction <add>, %13, %cst_13 [1] : vector<16x32xf32> to vector<16xf32>
    %15 = vector.shape_cast %14 : vector<16xf32> to vector<16x1xf32>
    %cst_14 = arith.constant 3.125000e-02 : f32
    %16 = vector.broadcast %cst_14 : f32 to vector<16x1xf32>
    %17 = arith.mulf %15, %16 : vector<16x1xf32>
    %18 = arith.mulf %12, %12 : vector<16x1xf32>
    %19 = arith.subf %17, %18 : vector<16x1xf32>
    %cst_15 = arith.constant 0.000000e+00 : f32
    %20 = vector.broadcast %cst_15 : f32 to vector<16x1xf32>
    %21 = arith.maximumf %19, %20 : vector<16x1xf32>
    %22 = vector.broadcast %12 : vector<16x1xf32> to vector<16x32xf32>
    %23 = arith.subf %0, %22 : vector<16x32xf32>
    %cst_16 = arith.constant 9.99999974E-6 : f32
    %24 = vector.broadcast %cst_16 : f32 to vector<16x1xf32>
    %25 = arith.addf %21, %24 : vector<16x1xf32>
    %26 = math.rsqrt %25 : vector<16x1xf32>
    %27 = vector.broadcast %26 : vector<16x1xf32> to vector<16x32xf32>
    %28 = arith.mulf %23, %27 : vector<16x32xf32>
    %29 = vector.broadcast %1 : vector<1x32xf32> to vector<16x32xf32>
    %30 = arith.mulf %28, %29 : vector<16x32xf32>
    %31 = vector.broadcast %2 : vector<1x32xf32> to vector<16x32xf32>
    %32 = arith.addf %30, %31 : vector<16x32xf32>
    %33 = arith.truncf %32 : vector<16x32xf32> to vector<16x32xbf16>
    %cst_17 = arith.constant dense<0.000000e+00> : vector<16x128xf32>
    %34 = tpu.matmul %33, %7, %cst_17 {dimension_numbers = #tpu.dot_dimension_numbers<[1], [0], [0], [1], [0, 0, 1, 1], [], []>} : vector<16x32xbf16>, vector<32x128xbf16>, vector<16x128xf32> -> vector<16x128xf32>
    %35 = vector.broadcast %3 : vector<1x128xf32> to vector<16x128xf32>
    %36 = arith.addf %34, %35 : vector<16x128xf32>
    %cst_18 = arith.constant 5.000000e-01 : f32
    %37 = vector.broadcast %cst_18 : f32 to vector<16x128xf32>
    %38 = arith.mulf %37, %36 : vector<16x128xf32>
    %39 = arith.mulf %36, %36 : vector<16x128xf32>
    %cst_19 = arith.constant 4.471500e-02 : f32
    %40 = vector.broadcast %cst_19 : f32 to vector<16x128xf32>
    %41 = arith.mulf %40, %39 : vector<16x128xf32>
    %42 = arith.mulf %41, %36 : vector<16x128xf32>
    %43 = arith.addf %36, %42 : vector<16x128xf32>
    %cst_20 = arith.constant 0.797884583 : f32
    %44 = vector.broadcast %cst_20 : f32 to vector<16x128xf32>
    %45 = arith.mulf %44, %43 : vector<16x128xf32>
    %46 = math.tanh %45 : vector<16x128xf32>
    %cst_21 = arith.constant 1.000000e+00 : f32
    %47 = vector.broadcast %cst_21 : f32 to vector<16x128xf32>
    %48 = arith.addf %47, %46 : vector<16x128xf32>
    %49 = arith.mulf %38, %48 : vector<16x128xf32>
    %50 = arith.truncf %49 : vector<16x128xf32> to vector<16x128xbf16>
    %cst_22 = arith.constant dense<0.000000e+00> : vector<16x32xf32>
    %51 = tpu.matmul %50, %8, %cst_22 {dimension_numbers = #tpu.dot_dimension_numbers<[1], [0], [0], [1], [0, 0, 1, 1], [], []>} : vector<16x128xbf16>, vector<128x32xbf16>, vector<16x32xf32> -> vector<16x32xf32>
    %52 = vector.broadcast %4 : vector<1x32xf32> to vector<16x32xf32>
    %53 = arith.addf %51, %52 : vector<16x32xf32>
    %cst_23 = arith.constant dense<0.000000e+00> : vector<16xf32>
    %54 = vector.multi_reduction <add>, %53, %cst_23 [1] : vector<16x32xf32> to vector<16xf32>
    %55 = vector.shape_cast %54 : vector<16xf32> to vector<16x1xf32>
    %cst_24 = arith.constant 3.125000e-02 : f32
    %56 = vector.broadcast %cst_24 : f32 to vector<16x1xf32>
    %57 = arith.mulf %55, %56 : vector<16x1xf32>
    %58 = arith.mulf %53, %53 : vector<16x32xf32>
    %cst_25 = arith.constant dense<0.000000e+00> : vector<16xf32>
    %59 = vector.multi_reduction <add>, %58, %cst_25 [1] : vector<16x32xf32> to vector<16xf32>
    %60 = vector.shape_cast %59 : vector<16xf32> to vector<16x1xf32>
    %cst_26 = arith.constant 3.125000e-02 : f32
    %61 = vector.broadcast %cst_26 : f32 to vector<16x1xf32>
    %62 = arith.mulf %60, %61 : vector<16x1xf32>
    %63 = arith.mulf %57, %57 : vector<16x1xf32>
    %64 = arith.subf %62, %63 : vector<16x1xf32>
    %cst_27 = arith.constant 0.000000e+00 : f32
    %65 = vector.broadcast %cst_27 : f32 to vector<16x1xf32>
    %66 = arith.maximumf %64, %65 : vector<16x1xf32>
    %67 = vector.broadcast %57 : vector<16x1xf32> to vector<16x32xf32>
    %68 = arith.subf %53, %67 : vector<16x32xf32>
    %cst_28 = arith.constant 9.99999974E-6 : f32
    %69 = vector.broadcast %cst_28 : f32 to vector<16x1xf32>
    %70 = arith.addf %66, %69 : vector<16x1xf32>
    %71 = math.rsqrt %70 : vector<16x1xf32>
    %72 = vector.broadcast %71 : vector<16x1xf32> to vector<16x32xf32>
    %73 = arith.mulf %68, %72 : vector<16x32xf32>
    %74 = vector.broadcast %5 : vector<1x32xf32> to vector<16x32xf32>
    %75 = arith.mulf %73, %74 : vector<16x32xf32>
    %76 = vector.broadcast %6 : vector<1x32xf32> to vector<16x32xf32>
    %77 = arith.addf %75, %76 : vector<16x32xf32>
    %c0_29 = arith.constant 0 : index
    %c0_30 = arith.constant 0 : index
    %78 = vector.load %arg1[%c0_29, %c0_30] : memref<16x32xf32, #tpu.memory_space<vmem>>, vector<16x32xf32>
    %79 = arith.addf %77, %78 : vector<16x32xf32>
    %c0_31 = arith.constant 0 : index
    %c0_32 = arith.constant 0 : index
    %80 = vector.load %arg5[%c0_31, %c0_32] : memref<16x32xf32, #tpu.memory_space<vmem>>, vector<16x32xf32>
    tpu.vector_store %arg5[%c0_31, %c0_32], %79 {strides = array<i32>} : memref<16x32xf32, #tpu.memory_space<vmem>>, vector<16x32xf32>,
    return
  }
  func.func @transform_0(%arg0: i32) -> (i32, i32) {
    %c0_i32 = arith.constant 0 : i32
    %c0_i32_0 = arith.constant 0 : i32
    return %arg0, %c0_i32 : i32, i32
  }
  func.func @transform_1(%arg0: i32) -> (i32, i32) {
    %c0_i32 = arith.constant 0 : i32
    %c0_i32_0 = arith.constant 0 : i32
    %c0_i32_1 = arith.constant 0 : i32
    return %c0_i32, %c0_i32_0 : i32, i32
  }
  func.func @transform_2(%arg0: i32) -> (i32, i32) {
    %c0_i32 = arith.constant 0 : i32
    %c0_i32_0 = arith.constant 0 : i32
    %c0_i32_1 = arith.constant 0 : i32
    return %c0_i32, %c0_i32_0 : i32, i32
  }
  func.func @transform_3(%arg0: i32) -> (i32, i32) {
    %c0_i32 = arith.constant 0 : i32
    %c0_i32_0 = arith.constant 0 : i32
    %c0_i32_1 = arith.constant 0 : i32
    return %c0_i32, %c0_i32_0 : i32, i32
  }
  func.func @transform_4(%arg0: i32) -> (i32, i32) {
    %c0_i32 = arith.constant 0 : i32
    %c0_i32_0 = arith.constant 0 : i32
    return %arg0, %c0_i32 : i32, i32
  }
}

module attributes {stable_mosaic.version = 11 : i64} {
  func.func @_adapter_kernel(%arg0: i32, %arg1: memref<16x32xf32, #tpu.memory_space<vmem>>, %arg2: memref<8x128xf32, #tpu.memory_space<vmem>>, %arg3: memref<32x128xbf16, #tpu.memory_space<vmem>>, %arg4: memref<128x32xbf16, #tpu.memory_space<vmem>>, %arg5: memref<16x32xf32, #tpu.memory_space<vmem>>) attributes {dimension_semantics = [#tpu.dimension_semantics<parallel>], iteration_bounds = array<i64: 1>, scalar_prefetch = 0 : i64, scratch_operands = 0 : i64, tpu.core_type = #tpu.core_type<tc>, window_params = [{transform_indices = @transform_0, window_bounds = array<i64: 16, 32>}, {pipeline_mode = #tpu.pipeline_mode<synchronous>, transform_indices = @transform_1, window_bounds = array<i64: 8, 128>}, {pipeline_mode = #tpu.pipeline_mode<synchronous>, transform_indices = @transform_2, window_bounds = array<i64: 32, 128>}, {pipeline_mode = #tpu.pipeline_mode<synchronous>, transform_indices = @transform_3, window_bounds = array<i64: 128, 32>}, {transform_indices = @transform_4, window_bounds = array<i64: 16, 32>}]} {
    %c0 = arith.constant 0 : index
    %c0_0 = arith.constant 0 : index
    %0 = vector.load %arg1[%c0, %c0_0] : memref<16x32xf32, #tpu.memory_space<vmem>>, vector<16x32xf32>
    %c0_1 = arith.constant 0 : index
    %c0_2 = arith.constant 0 : index
    %1 = vector.load %arg2[%c0_1, %c0_2] : memref<8x128xf32, #tpu.memory_space<vmem>>, vector<1x32xf32>
    %c1 = arith.constant 1 : index
    %c0_3 = arith.constant 0 : index
    %2 = vector.load %arg2[%c1, %c0_3] : memref<8x128xf32, #tpu.memory_space<vmem>>, vector<1x32xf32>
    %c2 = arith.constant 2 : index
    %c0_4 = arith.constant 0 : index
    %3 = vector.load %arg2[%c2, %c0_4] : memref<8x128xf32, #tpu.memory_space<vmem>>, vector<1x128xf32>
    %c3 = arith.constant 3 : index
    %c0_5 = arith.constant 0 : index
    %4 = vector.load %arg2[%c3, %c0_5] : memref<8x128xf32, #tpu.memory_space<vmem>>, vector<1x32xf32>
    %c4 = arith.constant 4 : index
    %c0_6 = arith.constant 0 : index
    %5 = vector.load %arg2[%c4, %c0_6] : memref<8x128xf32, #tpu.memory_space<vmem>>, vector<1x32xf32>
    %c5 = arith.constant 5 : index
    %c0_7 = arith.constant 0 : index
    %6 = vector.load %arg2[%c5, %c0_7] : memref<8x128xf32, #tpu.memory_space<vmem>>, vector<1x32xf32>
    %c0_8 = arith.constant 0 : index
    %c0_9 = arith.constant 0 : index
    %7 = vector.load %arg3[%c0_8, %c0_9] : memref<32x128xbf16, #tpu.memory_space<vmem>>, vector<32x128xbf16>
    %c0_10 = arith.constant 0 : index
    %c0_11 = arith.constant 0 : index
    %8 = vector.load %arg4[%c0_10, %c0_11] : memref<128x32xbf16, #tpu.memory_space<vmem>>, vector<128x32xbf16>
    %cst = arith.constant dense<0.000000e+00> : vector<16xf32>
    %9 = vector.multi_reduction <add>, %0, %cst [1] : vector<16x32xf32> to vector<16xf32>
    %10 = vector.shape_cast %9 : vector<16xf32> to vector<16x1xf32>
    %cst_12 = arith.constant 3.125000e-02 : f32
    %11 = vector.broadcast %cst_12 : f32 to vector<16x1xf32>
    %12 = arith.mulf %10, %11 : vector<16x1xf32>
    %13 = arith.mulf %0, %0 : vector<16x32xf32>
    %cst_13 = arith.constant dense<0.000000e+00> : vector<16xf32>
    %14 = vector.multi_reduction <add>, %13, %cst_13 [1] : vector<16x32xf32> to vector<16xf32>
    %15 = vector.shape_cast %14 : vector<16xf32> to vector<16x1xf32>
    %cst_14 = arith.constant 3.125000e-02 : f32
    %16 = vector.broadcast %cst_14 : f32 to vector<16x1xf32>
    %17 = arith.mulf %15, %16 : vector<16x1xf32>
    %18 = arith.mulf %12, %12 : vector<16x1xf32>
    %19 = arith.subf %17, %18 : vector<16x1xf32>
    %cst_15 = arith.constant 0.000000e+00 : f32
    %20 = vector.broadcast %cst_15 : f32 to vector<16x1xf32>
    %21 = arith.maximumf %19, %20 : vector<16x1xf32>
    %22 = vector.broadcast %12 : vector<16x1xf32> to vector<16x32xf32>
    %23 = arith.subf %0, %22 : vector<16x32xf32>
    %cst_16 = arith.constant 9.99999974E-6 : f32
    %24 = vector.broadcast %cst_16 : f32 to vector<16x1xf32>
    %25 = arith.addf %21, %24 : vector<16x1xf32>
    %26 = math.rsqrt %25 : vector<16x1xf32>
    %27 = vector.broadcast %26 : vector<16x1xf32> to vector<16x32xf32>
    %28 = arith.mulf %23, %27 : vector<16x32xf32>
    %29 = vector.broadcast %1 : vector<1x32xf32> to vector<16x32xf32>
    %30 = arith.mulf %28, %29 : vector<16x32xf32>
    %31 = vector.broadcast %2 : vector<1x32xf32> to vector<16x32xf32>
    %32 = arith.addf %30, %31 : vector<16x32xf32>
    %33 = arith.truncf %32 : vector<16x32xf32> to vector<16x32xbf16>
    %cst_17 = arith.constant dense<0.000000e+00> : vector<16x128xf32>
    %34 = tpu.matmul %33, %7, %cst_17 {dimension_numbers = #tpu.dot_dimension_numbers<[1], [0], [0], [1], [0, 0, 1, 1], [], []>} : vector<16x32xbf16>, vector<32x128xbf16>, vector<16x128xf32> -> vector<16x128xf32>
    %35 = vector.broadcast %3 : vector<1x128xf32> to vector<16x128xf32>
    %36 = arith.addf %34, %35 : vector<16x128xf32>
    %cst_18 = arith.constant 5.000000e-01 : f32
    %37 = vector.broadcast %cst_18 : f32 to vector<16x128xf32>
    %38 = arith.mulf %37, %36 : vector<16x128xf32>
    %39 = arith.mulf %36, %36 : vector<16x128xf32>
    %cst_19 = arith.constant 4.471500e-02 : f32
    %40 = vector.broadcast %cst_19 : f32 to vector<16x128xf32>
    %41 = arith.mulf %40, %39 : vector<16x128xf32>
    %42 = arith.mulf %41, %36 : vector<16x128xf32>
    %43 = arith.addf %36, %42 : vector<16x128xf32>
    %cst_20 = arith.constant 0.797884583 : f32
    %44 = vector.broadcast %cst_20 : f32 to vector<16x128xf32>
    %45 = arith.mulf %44, %43 : vector<16x128xf32>
    %46 = math.tanh %45 : vector<16x128xf32>
    %cst_21 = arith.constant 1.000000e+00 : f32
    %47 = vector.broadcast %cst_21 : f32 to vector<16x128xf32>
    %48 = arith.addf %47, %46 : vector<16x128xf32>
    %49 = arith.mulf %38, %48 : vector<16x128xf32>
    %50 = arith.truncf %49 : vector<16x128xf32> to vector<16x128xbf16>
    %cst_22 = arith.constant dense<0.000000e+00> : vector<16x32xf32>
    %51 = tpu.matmul %50, %8, %cst_22 {dimension_numbers = #tpu.dot_dimension_numbers<[1], [0], [0], [1], [0, 0, 1, 1], [], []>} : vector<16x128xbf16>, vector<128x32xbf16>, vector<16x32xf32> -> vector<16x32xf32>
    %52 = vector.broadcast %4 : vector<1x32xf32> to vector<16x32xf32>
    %53 = arith.addf %51, %52 : vector<16x32xf32>
    %cst_23 = arith.constant dense<0.000000e+00> : vector<16xf32>
    %54 = vector.multi_reduction <add>, %53, %cst_23 [1] : vector<16x32xf32> to vector<16xf32>
    %55 = vector.shape_cast %54 : vector<16xf32> to vector<16x1xf32>
    %cst_24 = arith.constant 3.125000e-02 : f32
    %56 = vector.broadcast %cst_24 : f32 to vector<16x1xf32>
    %57 = arith.mulf %55, %56 : vector<16x1xf32>
    %58 = arith.mulf %53, %53 : vector<16x32xf32>
    %cst_25 = arith.constant dense<0.000000e+00> : vector<16xf32>
    %59 = vector.multi_reduction <add>, %58, %cst_25 [1] : vector<16x32xf32> to vector<16xf32>
    %60 = vector.shape_cast %59 : vector<16xf32> to vector<16x1xf32>
    %cst_26 = arith.constant 3.125000e-02 : f32
    %61 = vector.broadcast %cst_26 : f32 to vector<16x1xf32>
    %62 = arith.mulf %60, %61 : vector<16x1xf32>
    %63 = arith.mulf %57, %57 : vector<16x1xf32>
    %64 = arith.subf %62, %63 : vector<16x1xf32>
    %cst_27 = arith.constant 0.000000e+00 : f32
    %65 = vector.broadcast %cst_27 : f32 to vector<16x1xf32>
    %66 = arith.maximumf %64, %65 : vector<16x1xf32>
    %67 = vector.broadcast %57 : vector<16x1xf32> to vector<16x32xf32>
    %68 = arith.subf %53, %67 : vector<16x32xf32>
    %cst_28 = arith.constant 9.99999974E-6 : f32
    %69 = vector.broadcast %cst_28 : f32 to vector<16x1xf32>
    %70 = arith.addf %66, %69 : vector<16x1xf32>
    %71 = math.rsqrt %70 : vector<16x1xf32>
    %72 = vector.broadcast %71 : vector<16x1xf32> to vector<16x32xf32>
    %73 = arith.mulf %68, %72 : vector<16x32xf32>
    %74 = vector.broadcast %5 : vector<1x32xf32> to vector<16x32xf32>
    %75 = arith.mulf %73, %74 : vector<16x32xf32>
    %76 = vector.broadcast %6 : vector<1x32xf32> to vector<16x32xf32>
    %77 = arith.addf %75, %76 : vector<16x32xf32>
    %c0_29 = arith.constant 0 : index
    %c0_30 = arith.constant 0 : index
    %78 = vector.load %arg1[%c0_29, %c0_30] : memref<16x32xf32, #tpu.memory_space<vmem>>, vector<16x32xf32>
    %79 = arith.addf %77, %78 : vector<16x32xf32>
    %c0_31 = arith.constant 0 : index
    %c0_32 = arith.constant 0 : index
    %80 = vector.load %arg5[%c0_31, %c0_32] : memref<16x32xf32, #tpu.memory_space<vmem>>, vector<16x32xf32>
    tpu.vector_store %arg5[%c0_31, %c0_32], %79 {strides = array<i32>} : memref<16x32xf32, #tpu.memory_space<vmem>>, vector<16x32xf32>,
    return
  }
  func.func @transform_0(%arg0: i32) -> (i32, i32) {
    %c0_i32 = arith.constant 0 : i32
    %c0_i32_0 = arith.constant 0 : i32
    return %arg0, %c0_i32 : i32, i32
  }
  func.func @transform_1(%arg0: i32) -> (i32, i32) {
    %c0_i32 = arith.constant 0 : i32
    %c0_i32_0 = arith.constant 0 : i32
    %c0_i32_1 = arith.constant 0 : i32
    return %c0_i32, %c0_i32_0 : i32, i32
  }
  func.func @transform_2(%arg0: i32) -> (i32, i32) {
    %c0_i32 = arith.constant 0 : i32
    %c0_i32_0 = arith.constant 0 : i32
    %c0_i32_1 = arith.constant 0 : i32
    return %c0_i32, %c0_i32_0 : i32, i32
  }
  func.func @transform_3(%arg0: i32) -> (i32, i32) {
    %c0_i32 = arith.constant 0 : i32
    %c0_i32_0 = arith.constant 0 : i32
    %c0_i32_1 = arith.constant 0 : i32
    return %c0_i32, %c0_i32_0 : i32, i32
  }
  func.func @transform_4(%arg0: i32) -> (i32, i32) {
    %c0_i32 = arith.constant 0 : i32
    %c0_i32_0 = arith.constant 0 : i32
    return %arg0, %c0_i32 : i32, i32
  }
}

</mosaic_0001>

<llo_original>
// kernel: tpu_custom_call.1
$region0: #{tpu_custom_call.1}
  #allocation0 [shape = 'u32[]', space=smem, size = 0x4, offset = 0x4, fixed_abs, tag = 'smem constant byte address 0x4 - core index']
  #allocation1 [shape = 'u32[144,128]{1,0:T(1,128)}', space=vmem, size = 0x12000, scoped, tag = 'internal scratch']
  %s0 = inlined_call_operand.vmem [shape: f32[16,32], index: 0, kind: input, shape index: {}]
  %s1 = inlined_call_operand.vmem [shape: f32[8,128], index: 1, kind: input, shape index: {}]
  %s2 = inlined_call_operand.vmem [shape: bf16[32,128], index: 2, kind: input, shape index: {}]
  %s3 = inlined_call_operand.vmem [shape: bf16[128,32], index: 3, kind: input, shape index: {}]
  %s4 = inlined_call_operand.hbm [shape: f32[16,32], index: 4, kind: output, shape index: {}]
  %s5 = sld [smem:[#allocation0]]
  $region26: #{tpu_custom_call.1} parent=0
    _
  %s7 = ssub.s32 1, %s5
  %s8 = scalar_select 0, %s7, %s5
  $region1: #{tpu_custom_call.1} parent=0
    #allocation2 [shape = 'u8[8192]{0}', space=vmem, size = 0x2000, scoped, tag = 'output window, operand 0, single buffered']
    #allocation3 [shape = 's32[1]{0}', space=sflag, size = 0x4, scoped, tag = 'scoped memory for tpu_custom_call.1']
    %9 = vsyncpa [#allocation3], 0
    // Predicated region
    $region2: #{tpu_custom_call.1} parent=1 // pred_check
      _
    $region3: #{tpu_custom_call.1} parent=1 // pred_check_branch
      %11 = sbr.rel (0) target = $region5
    $region4: #{tpu_custom_call.1} parent=1 // pred_region
      _
    $region5: #{tpu_custom_call.1} parent=1 // pred_fallthru
      _
    // Predicated region
    $region6: #{tpu_custom_call.1} parent=1 // pred_check
      _
    $region7: #{tpu_custom_call.1} parent=1 // pred_check_branch
      %13 = sbr.rel (0) target = $region9
    $region8: #{tpu_custom_call.1} parent=1 // pred_region
      _
    $region9: #{tpu_custom_call.1} parent=1 // pred_fallthru
      _
    // Predicated region
    $region10: #{tpu_custom_call.1} parent=1 // pred_check
      _
    $region11: #{tpu_custom_call.1} parent=1 // pred_check_branch
      %15 = sbr.rel (0) target = $region13
    $region12: #{tpu_custom_call.1} parent=1 // pred_region
      _
    $region13: #{tpu_custom_call.1} parent=1 // pred_fallthru
      _
    // Predicated region
    $region14: #{tpu_custom_call.1} parent=1 // pred_check
      _
    $region15: #{tpu_custom_call.1} parent=1 // pred_check_branch
      %17 = sbr.rel (0) target = $region17
    $region16: #{tpu_custom_call.1} parent=1 // pred_region
      _
    $region17: #{tpu_custom_call.1} parent=1 // pred_fallthru
      _
    %v19 = vld [vmem:[%s0] sm:$0xff]
    %v20 = vld [vmem:[%s0 + $0x8] sm:$0xff]
    %v21 = vld [vmem:[%s1] sm:$0x1]
    %v22 = vld [vmem:[%s1 + $0x1] sm:$0x1]
    %v23 = vld [vmem:[%s1 + $0x2] sm:$0x1]
    %v24 = vld [vmem:[%s1 + $0x3] sm:$0x1]
    %v25 = vld [vmem:[%s1 + $0x4] sm:$0x1]
    %v26 = vld [vmem:[%s1 + $0x5] sm:$0x1]
    %v27 = vld [vmem:[%s2] sm:$0xf]
    %v28 = vld [vmem:[%s2 + $0x4] sm:$0xf]
    %v29 = vld [vmem:[%s2 + $0x8] sm:$0xf]
    %v30 = vld [vmem:[%s2 + $0xc] sm:$0xf]
    %v31 = vld [vmem:[%s3] sm:$0xf]
    %v32 = vld [vmem:[%s3 + $0x4] sm:$0xf]
    %v33 = vld [vmem:[%s3 + $0x8] sm:$0xf]
    %v34 = vld [vmem:[%s3 + $0xc] sm:$0xf]
    %v35 = vld [vmem:[%s3 + $0x10] sm:$0xf]
    %v36 = vld [vmem:[%s3 + $0x14] sm:$0xf]
    %v37 = vld [vmem:[%s3 + $0x18] sm:$0xf]
    %v38 = vld [vmem:[%s3 + $0x1c] sm:$0xf]
    %v39 = vld [vmem:[%s3 + $0x20] sm:$0xf]
    %v40 = vld [vmem:[%s3 + $0x24] sm:$0xf]
    %v41 = vld [vmem:[%s3 + $0x28] sm:$0xf]
    %v42 = vld [vmem:[%s3 + $0x2c] sm:$0xf]
    %v43 = vld [vmem:[%s3 + $0x30] sm:$0xf]
    %v44 = vld [vmem:[%s3 + $0x34] sm:$0xf]
    %v45 = vld [vmem:[%s3 + $0x38] sm:$0xf]
    %v46 = vld [vmem:[%s3 + $0x3c] sm:$0xf]
    %vm47 = vcmask 261120
    %v48 = vsel %vm47, %v19, 0.0
    %49 = vadd.xlane.f32.xlu0 %v48
    %v50 = vpop.xlane.xlu0 %49
    %v51 = vsel %vm47, %v20, 0.0
    %52 = vadd.xlane.f32.xlu0 %v51
    %v53 = vpop.xlane.xlu0 %52
    %v54 = vmul.f32 %v50, 0.03125
    %v55 = vmul.f32 %v53, 0.03125
    %v56 = vmul.f32 %v19, %v19
    %v57 = vmul.f32 %v20, %v20
    %v58 = vsel %vm47, %v56, 0.0
    %59 = vadd.xlane.f32.xlu0 %v58
    %v60 = vpop.xlane.xlu0 %59
    %v61 = vsel %vm47, %v57, 0.0
    %62 = vadd.xlane.f32.xlu0 %v61
    %v63 = vpop.xlane.xlu0 %62
    %v64 = vmul.f32 %v60, 0.03125
    %v65 = vmul.f32 %v63, 0.03125
    %v66 = vmul.f32 %v54, %v54
    %v67 = vmul.f32 %v55, %v55
    %v68 = vsub.f32 %v64, %v66
    %v69 = vsub.f32 %v65, %v67
    %v70 = vmax.f32 %v68, 0.0
    %v71 = vmax.f32 %v69, 0.0
    %v72 = vsub.f32 %v19, %v54
    %v73 = vsub.f32 %v20, %v55
    %v74 = vadd.f32 %v70, 1e-05
    %v75 = vadd.f32 %v71, 1e-05
    %v76 = vrsqrt.pop %v74
    %v77 = vrsqrt.pop %v75
    %v78 = vmul.f32 %v72, %v76
    %v79 = vmul.f32 %v73, %v77
    %v80 = vlaneseq
    %v81 = vshrl.u32 %v80, 7
    %v82 = vsub.s32 0, %v81
    %v83 = vrot.slane %v21, %v82
    %v84 = vmul.f32 %v78, %v83
    %v85 = vmul.f32 %v79, %v83
    %v86 = vlaneseq
    %v87 = vshrl.u32 %v86, 7
    %v88 = vsub.s32 0, %v87
    %v89 = vrot.slane %v22, %v88
    %v90 = vadd.f32 %v84, %v89
    %v91 = vadd.f32 %v85, %v89
    %v92 = vpack.c.bf16 %v91, %v90
    %v93 = vlaneseq
    %v94 = vshrl.u32 %v93, 7
    %v95 = vsub.s32 0, %v94
    %v96 = vrot.slane %v23, %v95
    %v101 = vunpack.c.l.b16 %v27
    %v102 = vunpack.c.l.b16 %v28
    %v103 = vunpack.c.l.b16 %v29
    %v104 = vunpack.c.l.b16 %v30
    %v105 = vpack.c.b16 %v102, %v101
    %v106 = vpack.c.b16 %v104, %v103
    %v110 = vsel %vm47, %v92, 0
    %112 = vmatprep.subr.bf16.mxu0 0
    %113 = vmatpush1.bf16.msra.mxu0 %v105
    %114 = vmatprep.subr.bf16.mxu0 0
    %115 = vmatpush1.bf16.msra.mxu0 %v106
    %116 = vmatprep.subr.bf16.mxu0 0
    %117 = vmatpush1.bf16.msra.mxu0 0
    %118 = vmatprep.subr.bf16.mxu0 0
    %119 = vmatpush1.bf16.msra.mxu0 0
    %120 = vmatprep.subr.bf16.mxu0 0
    %121 = vmatpush1.bf16.msra.mxu0 0
    %122 = vmatprep.subr.bf16.mxu0 0
    %123 = vmatpush1.bf16.msra.mxu0 0
    %124 = vmatprep.subr.bf16.mxu0 0
    %125 = vmatpush1.bf16.msra.mxu0 0
    %126 = vmatprep.subr.bf16.mxu0 0
    %127 = vmatpush1.bf16.msra.mxu0 0
    %128 = vmatprep.subr.bf16.mxu0 0
    %129 = vmatpush1.bf16.msra.mxu0 0
    %130 = vmatprep.subr.bf16.mxu0 0
    %131 = vmatpush1.bf16.msra.mxu0 0
    %132 = vmatprep.subr.bf16.mxu0 0
    %133 = vmatpush1.bf16.msra.mxu0 0
    %134 = vmatprep.subr.bf16.mxu0 0
    %135 = vmatpush1.bf16.msra.mxu0 0
    %136 = vmatprep.subr.bf16.mxu0 0
    %137 = vmatpush1.bf16.msra.mxu0 0
    %138 = vmatprep.subr.bf16.mxu0 0
    %139 = vmatpush1.bf16.msra.mxu0 0
    %140 = vmatprep.subr.bf16.mxu0 0
    %141 = vmatpush1.bf16.msra.mxu0 0
    %142 = vmatprep.subr.bf16.mxu0 0
    %143 = vmatpush1.bf16.msra.mxu0 0
    %144 = vmatprep.mubr.bf16.mxu0 0
    %145 = vmatmul.mubr.bf16.gmra.mrb[0].mxu0 %v110
    %v146 = vpop.f32.mrb[0].mxu0
    %v147 = vadd.f32 %v96, %v146
    %v148 = vpop.f32.mrb[0].mxu0
    %v149 = vpop.f32.mrb[0].mxu0
    %v150 = vadd.f32 %v96, %v149
    %v151 = vpop.f32.mrb[0].mxu0
    %152 = vdwg.mxu0
    %v153 = vmul.f32 %v147, 0.5
    %v154 = vmul.f32 %v150, 0.5
    %v155 = vmul.f32 %v147, %v147
    %v156 = vmul.f32 %v150, %v150
    %v157 = vmul.f32 %v155, 0.044715
    %v158 = vmul.f32 %v156, 0.044715
    %v159 = vmul.f32 %v157, %v147
    %v160 = vmul.f32 %v158, %v150
    %v161 = vadd.f32 %v147, %v159
    %v162 = vadd.f32 %v150, %v160
    %v163 = vmul.f32 %v161, 0.7978846
    %v164 = vmul.f32 %v162, 0.7978846
    %v165 = vtanh.pop %v163
    %v166 = vtanh.pop %v164
    %v167 = vadd.f32 %v165, 1.0
    %v168 = vadd.f32 %v166, 1.0
    %v169 = vmul.f32 %v153, %v167
    %v170 = vmul.f32 %v154, %v168
    %v171 = vpack.c.bf16 %v170, %v169
    %v172 = vlaneseq
    %v173 = vshrl.u32 %v172, 7
    %v174 = vsub.s32 0, %v173
    %v175 = vrot.slane %v24, %v174
    %v192 = vunpack.c.l.b16 %v31
    %v193 = vunpack.c.l.b16 %v32
    %v194 = vunpack.c.l.b16 %v33
    %v195 = vunpack.c.l.b16 %v34
    %v196 = vunpack.c.l.b16 %v35
    %v197 = vunpack.c.l.b16 %v36
    %v198 = vunpack.c.l.b16 %v37
    %v199 = vunpack.c.l.b16 %v38
    %v200 = vunpack.c.l.b16 %v39
    %v201 = vunpack.c.l.b16 %v40
    %v202 = vunpack.c.l.b16 %v41
    %v203 = vunpack.c.l.b16 %v42
    %v204 = vunpack.c.l.b16 %v43
    %v205 = vunpack.c.l.b16 %v44
    %v206 = vunpack.c.l.b16 %v45
    %v207 = vunpack.c.l.b16 %v46
    %v208 = vpack.c.b16 %v193, %v192
    %v209 = vpack.c.b16 %v195, %v194
    %v210 = vpack.c.b16 %v197, %v196
    %v211 = vpack.c.b16 %v199, %v198
    %v212 = vpack.c.b16 %v201, %v200
    %v213 = vpack.c.b16 %v203, %v202
    %v214 = vpack.c.b16 %v205, %v204
    %v215 = vpack.c.b16 %v207, %v206
    %224 = vmatprep.subr.bf16.mxu0 0
    %225 = vmatpush1.bf16.msra.mxu0 %v208
    %226 = vmatprep.subr.bf16.mxu0 0
    %227 = vmatpush1.bf16.msra.mxu0 %v209
    %228 = vmatprep.subr.bf16.mxu0 0
    %229 = vmatpush1.bf16.msra.mxu0 %v210
    %230 = vmatprep.subr.bf16.mxu0 0
    %231 = vmatpush1.bf16.msra.mxu0 %v211
    %232 = vmatprep.subr.bf16.mxu0 0
    %233 = vmatpush1.bf16.msra.mxu0 %v212
    %234 = vmatprep.subr.bf16.mxu0 0
    %235 = vmatpush1.bf16.msra.mxu0 %v213
    %236 = vmatprep.subr.bf16.mxu0 0
    %237 = vmatpush1.bf16.msra.mxu0 %v214
    %238 = vmatprep.subr.bf16.mxu0 0
    %239 = vmatpush1.bf16.msra.mxu0 %v215
    %240 = vmatprep.subr.bf16.mxu0 0
    %241 = vmatpush1.bf16.msra.mxu0 0
    %242 = vmatprep.subr.bf16.mxu0 0
    %243 = vmatpush1.bf16.msra.mxu0 0
    %244 = vmatprep.subr.bf16.mxu0 0
    %245 = vmatpush1.bf16.msra.mxu0 0
    %246 = vmatprep.subr.bf16.mxu0 0
    %247 = vmatpush1.bf16.msra.mxu0 0
    %248 = vmatprep.subr.bf16.mxu0 0
    %249 = vmatpush1.bf16.msra.mxu0 0
    %250 = vmatprep.subr.bf16.mxu0 0
    %251 = vmatpush1.bf16.msra.mxu0 0
    %252 = vmatprep.subr.bf16.mxu0 0
    %253 = vmatpush1.bf16.msra.mxu0 0
    %254 = vmatprep.subr.bf16.mxu0 0
    %255 = vmatpush1.bf16.msra.mxu0 0
    %256 = vmatprep.mubr.bf16.mxu0 0
    %257 = vmatmul.mubr.bf16.gmra.mrb[0].mxu0 %v171
    %v258 = vpop.f32.mrb[0].mxu0
    %v259 = vadd.f32 %v175, %v258
    %v260 = vpop.f32.mrb[0].mxu0
    %v261 = vpop.f32.mrb[0].mxu0
    %v262 = vadd.f32 %v175, %v261
    %v263 = vpop.f32.mrb[0].mxu0
    %264 = vdwg.mxu0
    %v265 = vsel %vm47, %v259, 0.0
    %266 = vadd.xlane.f32.xlu0 %v265
    %v267 = vpop.xlane.xlu0 %266
    %v268 = vsel %vm47, %v262, 0.0
    %269 = vadd.xlane.f32.xlu0 %v268
    %v270 = vpop.xlane.xlu0 %269
    %v271 = vmul.f32 %v267, 0.03125
    %v272 = vmul.f32 %v270, 0.03125
    %v273 = vmul.f32 %v259, %v259
    %v274 = vmul.f32 %v262, %v262
    %v275 = vsel %vm47, %v273, 0.0
    %276 = vadd.xlane.f32.xlu0 %v275
    %v277 = vpop.xlane.xlu0 %276
    %v278 = vsel %vm47, %v274, 0.0
    %279 = vadd.xlane.f32.xlu0 %v278
    %v280 = vpop.xlane.xlu0 %279
    %v281 = vmul.f32 %v277, 0.03125
    %v282 = vmul.f32 %v280, 0.03125
    %v283 = vmul.f32 %v271, %v271
    %v284 = vmul.f32 %v272, %v272
    %v285 = vsub.f32 %v281, %v283
    %v286 = vsub.f32 %v282, %v284
    %v287 = vmax.f32 %v285, 0.0
    %v288 = vmax.f32 %v286, 0.0
    %v289 = vsub.f32 %v259, %v271
    %v290 = vsub.f32 %v262, %v272
    %v291 = vadd.f32 %v287, 1e-05
    %v292 = vadd.f32 %v288, 1e-05
    %v293 = vrsqrt.pop %v291
    %v294 = vrsqrt.pop %v292
    %v295 = vmul.f32 %v289, %v293
    %v296 = vmul.f32 %v290, %v294
    %v297 = vlaneseq
    %v298 = vshrl.u32 %v297, 7
    %v299 = vsub.s32 0, %v298
    %v300 = vrot.slane %v25, %v299
    %v301 = vmul.f32 %v295, %v300
    %v302 = vmul.f32 %v296, %v300
    %v303 = vlaneseq
    %v304 = vshrl.u32 %v303, 7
    %v305 = vsub.s32 0, %v304
    %v306 = vrot.slane %v26, %v305
    %v307 = vadd.f32 %v301, %v306
    %v308 = vadd.f32 %v302, %v306
    %v309 = vadd.f32 %v307, %v19
    %v310 = vadd.f32 %v308, %v20
    %311 = vst.msk [vmem:[#allocation2] sm:$0xff] %vm47, %v309
    %312 = vst.msk [vmem:[#allocation2 + $0x8] sm:$0xff] %vm47, %v310
    // Predicated region
    $region18: #{tpu_custom_call.1} parent=1 // pred_check
      _
    $region19: #{tpu_custom_call.1} parent=1 // pred_check_branch
      %314 = sbr.rel (0) target = $region21
    $region20: #{tpu_custom_call.1} parent=1 // pred_region
      %s316 = ssub.s32 256, 256
      %317 = vsyncadd [#allocation3], %s316
      %s318 = sshll.u32 [#allocation2], 4
      %s319 = int_to_ptr.vmem [resolvable:$true] %s318
      %324 = dma.vmem_to_hbm [thread:$0]  %s319, 256, %s4, [#allocation3], 128, 128, 8
    $region21: #{tpu_custom_call.1} parent=1 // pred_fallthru
      _
    // Predicated region
    $region22: #{tpu_custom_call.1} parent=1 // pred_check
      _
    $region23: #{tpu_custom_call.1} parent=1 // pred_check_branch
      %326 = sbr.rel (0) target = $region25
    $region24: #{tpu_custom_call.1} parent=1 // pred_region
      %327 = dma.done [#allocation3], 256
    $region25: #{tpu_custom_call.1} parent=1 // pred_fallthru
      _
    %328 = vsyncpa [#allocation3], 1

// kernel: tpu_custom_call.1
$region0: #{tpu_custom_call.1}
  #allocation0 [shape = 'u32[]', space=smem, size = 0x4, offset = 0x4, fixed_abs, tag = 'smem constant byte address 0x4 - core index']
  #allocation1 [shape = 'u32[144,128]{1,0:T(1,128)}', space=vmem, size = 0x12000, scoped, tag = 'internal scratch']
  %s0 = inlined_call_operand.vmem [shape: f32[16,32], index: 0, kind: input, shape index: {}]
  %s1 = inlined_call_operand.vmem [shape: f32[8,128], index: 1, kind: input, shape index: {}]
  %s2 = inlined_call_operand.vmem [shape: bf16[32,128], index: 2, kind: input, shape index: {}]
  %s3 = inlined_call_operand.vmem [shape: bf16[128,32], index: 3, kind: input, shape index: {}]
  %s4 = inlined_call_operand.hbm [shape: f32[16,32], index: 4, kind: output, shape index: {}]
  %s5 = sld [smem:[#allocation0]]
  $region26: #{tpu_custom_call.1} parent=0
    _
  %s7 = ssub.s32 1, %s5
  %s8 = scalar_select 0, %s7, %s5
  $region1: #{tpu_custom_call.1} parent=0
    #allocation2 [shape = 'u8[8192]{0}', space=vmem, size = 0x2000, scoped, tag = 'output window, operand 0, single buffered']
    #allocation3 [shape = 's32[1]{0}', space=sflag, size = 0x4, scoped, tag = 'scoped memory for tpu_custom_call.1']
    %9 = vsyncpa [#allocation3], 0
    // Predicated region
    $region2: #{tpu_custom_call.1} parent=1 // pred_check
      _
    $region3: #{tpu_custom_call.1} parent=1 // pred_check_branch
      %11 = sbr.rel (0) target = $region5
    $region4: #{tpu_custom_call.1} parent=1 // pred_region
      _
    $region5: #{tpu_custom_call.1} parent=1 // pred_fallthru
      _
    // Predicated region
    $region6: #{tpu_custom_call.1} parent=1 // pred_check
      _
    $region7: #{tpu_custom_call.1} parent=1 // pred_check_branch
      %13 = sbr.rel (0) target = $region9
    $region8: #{tpu_custom_call.1} parent=1 // pred_region
      _
    $region9: #{tpu_custom_call.1} parent=1 // pred_fallthru
      _
    // Predicated region
    $region10: #{tpu_custom_call.1} parent=1 // pred_check
      _
    $region11: #{tpu_custom_call.1} parent=1 // pred_check_branch
      %15 = sbr.rel (0) target = $region13
    $region12: #{tpu_custom_call.1} parent=1 // pred_region
      _
    $region13: #{tpu_custom_call.1} parent=1 // pred_fallthru
      _
    // Predicated region
    $region14: #{tpu_custom_call.1} parent=1 // pred_check
      _
    $region15: #{tpu_custom_call.1} parent=1 // pred_check_branch
      %17 = sbr.rel (0) target = $region17
    $region16: #{tpu_custom_call.1} parent=1 // pred_region
      _
    $region17: #{tpu_custom_call.1} parent=1 // pred_fallthru
      _
    %v19 = vld [vmem:[%s0] sm:$0xff]
    %v20 = vld [vmem:[%s0 + $0x8] sm:$0xff]
    %v21 = vld [vmem:[%s1] sm:$0x1]
    %v22 = vld [vmem:[%s1 + $0x1] sm:$0x1]
    %v23 = vld [vmem:[%s1 + $0x2] sm:$0x1]
    %v24 = vld [vmem:[%s1 + $0x3] sm:$0x1]
    %v25 = vld [vmem:[%s1 + $0x4] sm:$0x1]
    %v26 = vld [vmem:[%s1 + $0x5] sm:$0x1]
    %v27 = vld [vmem:[%s2] sm:$0xf]
    %v28 = vld [vmem:[%s2 + $0x4] sm:$0xf]
    %v29 = vld [vmem:[%s2 + $0x8] sm:$0xf]
    %v30 = vld [vmem:[%s2 + $0xc] sm:$0xf]
    %v31 = vld [vmem:[%s3] sm:$0xf]
    %v32 = vld [vmem:[%s3 + $0x4] sm:$0xf]
    %v33 = vld [vmem:[%s3 + $0x8] sm:$0xf]
    %v34 = vld [vmem:[%s3 + $0xc] sm:$0xf]
    %v35 = vld [vmem:[%s3 + $0x10] sm:$0xf]
    %v36 = vld [vmem:[%s3 + $0x14] sm:$0xf]
    %v37 = vld [vmem:[%s3 + $0x18] sm:$0xf]
    %v38 = vld [vmem:[%s3 + $0x1c] sm:$0xf]
    %v39 = vld [vmem:[%s3 + $0x20] sm:$0xf]
    %v40 = vld [vmem:[%s3 + $0x24] sm:$0xf]
    %v41 = vld [vmem:[%s3 + $0x28] sm:$0xf]
    %v42 = vld [vmem:[%s3 + $0x2c] sm:$0xf]
    %v43 = vld [vmem:[%s3 + $0x30] sm:$0xf]
    %v44 = vld [vmem:[%s3 + $0x34] sm:$0xf]
    %v45 = vld [vmem:[%s3 + $0x38] sm:$0xf]
    %v46 = vld [vmem:[%s3 + $0x3c] sm:$0xf]
    %vm47 = vcmask 261120
    %v48 = vsel %vm47, %v19, 0.0
    %49 = vadd.xlane.f32.xlu0 %v48
    %v50 = vpop.xlane.xlu0 %49
    %v51 = vsel %vm47, %v20, 0.0
    %52 = vadd.xlane.f32.xlu0 %v51
    %v53 = vpop.xlane.xlu0 %52
    %v54 = vmul.f32 %v50, 0.03125
    %v55 = vmul.f32 %v53, 0.03125
    %v56 = vmul.f32 %v19, %v19
    %v57 = vmul.f32 %v20, %v20
    %v58 = vsel %vm47, %v56, 0.0
    %59 = vadd.xlane.f32.xlu0 %v58
    %v60 = vpop.xlane.xlu0 %59
    %v61 = vsel %vm47, %v57, 0.0
    %62 = vadd.xlane.f32.xlu0 %v61
    %v63 = vpop.xlane.xlu0 %62
    %v64 = vmul.f32 %v60, 0.03125
    %v65 = vmul.f32 %v63, 0.03125
    %v66 = vmul.f32 %v54, %v54
    %v67 = vmul.f32 %v55, %v55
    %v68 = vsub.f32 %v64, %v66
    %v69 = vsub.f32 %v65, %v67
    %v70 = vmax.f32 %v68, 0.0
    %v71 = vmax.f32 %v69, 0.0
    %v72 = vsub.f32 %v19, %v54
    %v73 = vsub.f32 %v20, %v55
    %v74 = vadd.f32 %v70, 1e-05
    %v75 = vadd.f32 %v71, 1e-05
    %v76 = vrsqrt.pop %v74
    %v77 = vrsqrt.pop %v75
    %v78 = vmul.f32 %v72, %v76
    %v79 = vmul.f32 %v73, %v77
    %v80 = vlaneseq
    %v81 = vshrl.u32 %v80, 7
    %v82 = vsub.s32 0, %v81
    %v83 = vrot.slane %v21, %v82
    %v84 = vmul.f32 %v78, %v83
    %v85 = vmul.f32 %v79, %v83
    %v86 = vlaneseq
    %v87 = vshrl.u32 %v86, 7
    %v88 = vsub.s32 0, %v87
    %v89 = vrot.slane %v22, %v88
    %v90 = vadd.f32 %v84, %v89
    %v91 = vadd.f32 %v85, %v89
    %v92 = vpack.c.bf16 %v91, %v90
    %v93 = vlaneseq
    %v94 = vshrl.u32 %v93, 7
    %v95 = vsub.s32 0, %v94
    %v96 = vrot.slane %v23, %v95
    %v101 = vunpack.c.l.b16 %v27
    %v102 = vunpack.c.l.b16 %v28
    %v103 = vunpack.c.l.b16 %v29
    %v104 = vunpack.c.l.b16 %v30
    %v105 = vpack.c.b16 %v102, %v101
    %v106 = vpack.c.b16 %v104, %v103
    %v110 = vsel %vm47, %v92, 0
    %112 = vmatprep.subr.bf16.mxu0 0
    %113 = vmatpush1.bf16.msra.mxu0 %v105
    %114 = vmatprep.subr.bf16.mxu0 0
    %115 = vmatpush1.bf16.msra.mxu0 %v106
    %116 = vmatprep.subr.bf16.mxu0 0
    %117 = vmatpush1.bf16.msra.mxu0 0
    %118 = vmatprep.subr.bf16.mxu0 0
    %119 = vmatpush1.bf16.msra.mxu0 0
    %120 = vmatprep.subr.bf16.mxu0 0
    %121 = vmatpush1.bf16.msra.mxu0 0
    %122 = vmatprep.subr.bf16.mxu0 0
    %123 = vmatpush1.bf16.msra.mxu0 0
    %124 = vmatprep.subr.bf16.mxu0 0
    %125 = vmatpush1.bf16.msra.mxu0 0
    %126 = vmatprep.subr.bf16.mxu0 0
    %127 = vmatpush1.bf16.msra.mxu0 0
    %128 = vmatprep.subr.bf16.mxu0 0
    %129 = vmatpush1.bf16.msra.mxu0 0
    %130 = vmatprep.subr.bf16.mxu0 0
    %131 = vmatpush1.bf16.msra.mxu0 0
    %132 = vmatprep.subr.bf16.mxu0 0
    %133 = vmatpush1.bf16.msra.mxu0 0
    %134 = vmatprep.subr.bf16.mxu0 0
    %135 = vmatpush1.bf16.msra.mxu0 0
    %136 = vmatprep.subr.bf16.mxu0 0
    %137 = vmatpush1.bf16.msra.mxu0 0
    %138 = vmatprep.subr.bf16.mxu0 0
    %139 = vmatpush1.bf16.msra.mxu0 0
    %140 = vmatprep.subr.bf16.mxu0 0
    %141 = vmatpush1.bf16.msra.mxu0 0
    %142 = vmatprep.subr.bf16.mxu0 0
    %143 = vmatpush1.bf16.msra.mxu0 0
    %144 = vmatprep.mubr.bf16.mxu0 0
    %145 = vmatmul.mubr.bf16.gmra.mrb[0].mxu0 %v110
    %v146 = vpop.f32.mrb[0].mxu0
    %v147 = vadd.f32 %v96, %v146
    %v148 = vpop.f32.mrb[0].mxu0
    %v149 = vpop.f32.mrb[0].mxu0
    %v150 = vadd.f32 %v96, %v149
    %v151 = vpop.f32.mrb[0].mxu0
    %152 = vdwg.mxu0
    %v153 = vmul.f32 %v147, 0.5
    %v154 = vmul.f32 %v150, 0.5
    %v155 = vmul.f32 %v147, %v147
    %v156 = vmul.f32 %v150, %v150
    %v157 = vmul.f32 %v155, 0.044715
    %v158 = vmul.f32 %v156, 0.044715
    %v159 = vmul.f32 %v157, %v147
    %v160 = vmul.f32 %v158, %v150
    %v161 = vadd.f32 %v147, %v159
    %v162 = vadd.f32 %v150, %v160
    %v163 = vmul.f32 %v161, 0.7978846
    %v164 = vmul.f32 %v162, 0.7978846
    %v165 = vtanh.pop %v163
    %v166 = vtanh.pop %v164
    %v167 = vadd.f32 %v165, 1.0
    %v168 = vadd.f32 %v166, 1.0
    %v169 = vmul.f32 %v153, %v167
    %v170 = vmul.f32 %v154, %v168
    %v171 = vpack.c.bf16 %v170, %v169
    %v172 = vlaneseq
    %v173 = vshrl.u32 %v172, 7
    %v174 = vsub.s32 0, %v173
    %v175 = vrot.slane %v24, %v174
    %v192 = vunpack.c.l.b16 %v31
    %v193 = vunpack.c.l.b16 %v32
    %v194 = vunpack.c.l.b16 %v33
    %v195 = vunpack.c.l.b16 %v34
    %v196 = vunpack.c.l.b16 %v35
    %v197 = vunpack.c.l.b16 %v36
    %v198 = vunpack.c.l.b16 %v37
    %v199 = vunpack.c.l.b16 %v38
    %v200 = vunpack.c.l.b16 %v39
    %v201 = vunpack.c.l.b16 %v40
    %v202 = vunpack.c.l.b16 %v41
    %v203 = vunpack.c.l.b16 %v42
    %v204 = vunpack.c.l.b16 %v43
    %v205 = vunpack.c.l.b16 %v44
    %v206 = vunpack.c.l.b16 %v45
    %v207 = vunpack.c.l.b16 %v46
    %v208 = vpack.c.b16 %v193, %v192
    %v209 = vpack.c.b16 %v195, %v194
    %v210 = vpack.c.b16 %v197, %v196
    %v211 = vpack.c.b16 %v199, %v198
    %v212 = vpack.c.b16 %v201, %v200
    %v213 = vpack.c.b16 %v203, %v202
    %v214 = vpack.c.b16 %v205, %v204
    %v215 = vpack.c.b16 %v207, %v206
    %224 = vmatprep.subr.bf16.mxu0 0
    %225 = vmatpush1.bf16.msra.mxu0 %v208
    %226 = vmatprep.subr.bf16.mxu0 0
    %227 = vmatpush1.bf16.msra.mxu0 %v209
    %228 = vmatprep.subr.bf16.mxu0 0
    %229 = vmatpush1.bf16.msra.mxu0 %v210
    %230 = vmatprep.subr.bf16.mxu0 0
    %231 = vmatpush1.bf16.msra.mxu0 %v211
    %232 = vmatprep.subr.bf16.mxu0 0
    %233 = vmatpush1.bf16.msra.mxu0 %v212
    %234 = vmatprep.subr.bf16.mxu0 0
    %235 = vmatpush1.bf16.msra.mxu0 %v213
    %236 = vmatprep.subr.bf16.mxu0 0
    %237 = vmatpush1.bf16.msra.mxu0 %v214
    %238 = vmatprep.subr.bf16.mxu0 0
    %239 = vmatpush1.bf16.msra.mxu0 %v215
    %240 = vmatprep.subr.bf16.mxu0 0
    %241 = vmatpush1.bf16.msra.mxu0 0
    %242 = vmatprep.subr.bf16.mxu0 0
    %243 = vmatpush1.bf16.msra.mxu0 0
    %244 = vmatprep.subr.bf16.mxu0 0
    %245 = vmatpush1.bf16.msra.mxu0 0
    %246 = vmatprep.subr.bf16.mxu0 0
    %247 = vmatpush1.bf16.msra.mxu0 0
    %248 = vmatprep.subr.bf16.mxu0 0
    %249 = vmatpush1.bf16.msra.mxu0 0
    %250 = vmatprep.subr.bf16.mxu0 0
    %251 = vmatpush1.bf16.msra.mxu0 0
    %252 = vmatprep.subr.bf16.mxu0 0
    %253 = vmatpush1.bf16.msra.mxu0 0
    %254 = vmatprep.subr.bf16.mxu0 0
    %255 = vmatpush1.bf16.msra.mxu0 0
    %256 = vmatprep.mubr.bf16.mxu0 0
    %257 = vmatmul.mubr.bf16.gmra.mrb[0].mxu0 %v171
    %v258 = vpop.f32.mrb[0].mxu0
    %v259 = vadd.f32 %v175, %v258
    %v260 = vpop.f32.mrb[0].mxu0
    %v261 = vpop.f32.mrb[0].mxu0
    %v262 = vadd.f32 %v175, %v261
    %v263 = vpop.f32.mrb[0].mxu0
    %264 = vdwg.mxu0
    %v265 = vsel %vm47, %v259, 0.0
    %266 = vadd.xlane.f32.xlu0 %v265
    %v267 = vpop.xlane.xlu0 %266
    %v268 = vsel %vm47, %v262, 0.0
    %269 = vadd.xlane.f32.xlu0 %v268
    %v270 = vpop.xlane.xlu0 %269
    %v271 = vmul.f32 %v267, 0.03125
    %v272 = vmul.f32 %v270, 0.03125
    %v273 = vmul.f32 %v259, %v259
    %v274 = vmul.f32 %v262, %v262
    %v275 = vsel %vm47, %v273, 0.0
    %276 = vadd.xlane.f32.xlu0 %v275
    %v277 = vpop.xlane.xlu0 %276
    %v278 = vsel %vm47, %v274, 0.0
    %279 = vadd.xlane.f32.xlu0 %v278
    %v280 = vpop.xlane.xlu0 %279
    %v281 = vmul.f32 %v277, 0.03125
    %v282 = vmul.f32 %v280, 0.03125
    %v283 = vmul.f32 %v271, %v271
    %v284 = vmul.f32 %v272, %v272
    %v285 = vsub.f32 %v281, %v283
    %v286 = vsub.f32 %v282, %v284
    %v287 = vmax.f32 %v285, 0.0
    %v288 = vmax.f32 %v286, 0.0
    %v289 = vsub.f32 %v259, %v271
    %v290 = vsub.f32 %v262, %v272
    %v291 = vadd.f32 %v287, 1e-05
    %v292 = vadd.f32 %v288, 1e-05
    %v293 = vrsqrt.pop %v291
    %v294 = vrsqrt.pop %v292
    %v295 = vmul.f32 %v289, %v293
    %v296 = vmul.f32 %v290, %v294
    %v297 = vlaneseq
    %v298 = vshrl.u32 %v297, 7
    %v299 = vsub.s32 0, %v298
    %v300 = vrot.slane %v25, %v299
    %v301 = vmul.f32 %v295, %v300
    %v302 = vmul.f32 %v296, %v300
    %v303 = vlaneseq
    %v304 = vshrl.u32 %v303, 7
    %v305 = vsub.s32 0, %v304
    %v306 = vrot.slane %v26, %v305
    %v307 = vadd.f32 %v301, %v306
    %v308 = vadd.f32 %v302, %v306
    %v309 = vadd.f32 %v307, %v19
    %v310 = vadd.f32 %v308, %v20
    %311 = vst.msk [vmem:[#allocation2] sm:$0xff] %vm47, %v309
    %312 = vst.msk [vmem:[#allocation2 + $0x8] sm:$0xff] %vm47, %v310
    // Predicated region
    $region18: #{tpu_custom_call.1} parent=1 // pred_check
      _
    $region19: #{tpu_custom_call.1} parent=1 // pred_check_branch
      %314 = sbr.rel (0) target = $region21
    $region20: #{tpu_custom_call.1} parent=1 // pred_region
      %s316 = ssub.s32 256, 256
      %317 = vsyncadd [#allocation3], %s316
      %s318 = sshll.u32 [#allocation2], 4
      %s319 = int_to_ptr.vmem [resolvable:$true] %s318
      %324 = dma.vmem_to_hbm [thread:$0]  %s319, 256, %s4, [#allocation3], 128, 128, 8
    $region21: #{tpu_custom_call.1} parent=1 // pred_fallthru
      _
    // Predicated region
    $region22: #{tpu_custom_call.1} parent=1 // pred_check
      _
    $region23: #{tpu_custom_call.1} parent=1 // pred_check_branch
      %326 = sbr.rel (0) target = $region25
    $region24: #{tpu_custom_call.1} parent=1 // pred_region
      %327 = dma.done [#allocation3], 256
    $region25: #{tpu_custom_call.1} parent=1 // pred_fallthru
      _
    %328 = vsyncpa [#allocation3], 1

</llo_original>
